<compile_context>
chip_gen: v5e
topology: v5e:2x2
jax: 0.10.0
libtpu: 0.0.40
codegen_flags: <defaults>
</compile_context>

<pallas_src>
import functools

import jax
import jax.numpy as jnp
from jax import lax
from jax.experimental import pallas as pl
from jax.experimental.pallas import tpu as pltpu

_MIB = 1024 * 1024


def _focal_loss_kernel(pred_ref, target_ref, out_ref, acc_ref, *,
                       gamma, n_rows, tile_rows, tiles_per_slice, needs_mask):
    p = pl.program_id(0)          # parallel batch-slice axis (megacore on v7x)
    j = pl.program_id(1)          # sequential reduction axis within a slice

    @pl.when(j == 0)
    def _():
        acc_ref[...] = jnp.zeros_like(acc_ref)

    x = pred_ref[...].astype(jnp.float32)      # (TN, C) logits, upcast in VMEM
    t = target_ref[...]                        # (TN, 1) int32 labels

    # Numerically stable log-sum-exp along the class axis (dim=1).
    row_max = jnp.max(x, axis=1, keepdims=True)                           # (TN, 1)
    lse = jnp.log(jnp.sum(jnp.exp(x - row_max), axis=1, keepdims=True))   # (TN, 1)

    # Gather the target logit from x (not from the shifted tensor), so the
    # only consumer of (x - row_max) is the fused exp+reduce above.
    cls_idx = lax.broadcasted_iota(jnp.int32, x.shape, 1)
    x_at_t = jnp.sum(jnp.where(cls_idx == t, x, 0.0), axis=1, keepdims=True)
    logpt = (x_at_t - row_max) - lse                                      # (TN, 1)

    ce_loss = -logpt
    pt = jnp.exp(logpt)
    one_minus_pt = 1.0 - pt
    if isinstance(gamma, int):
        weight = lax.integer_pow(one_minus_pt, gamma)   # VPU multiplies
    else:
        weight = one_minus_pt ** gamma
    focal = weight * ce_loss                                              # (TN, 1)

    if needs_mask:
        # Mask rows past N (padded partial tile and clamped duplicate tiles)
        # out of the cross-row sum.  All reductions above are per-row (axis=1),
        # so garbage in padded rows never leaks into valid rows.
        row_ids = ((p * tiles_per_slice + j) * tile_rows
                   + lax.broadcasted_iota(jnp.int32, focal.shape, 0))
        focal = jnp.where(row_ids < n_rows, focal, 0.0)

    acc_ref[...] += jnp.sum(focal, axis=0, keepdims=True)                 # (1, 1)

    @pl.when(j == pl.num_programs(1) - 1)
    def _():
        out_ref[...] = acc_ref[...]          # per-slice partial sum


def _vmem_limits():
    """(scoped vmem_limit_bytes, tile-sizing budget) per TPU generation."""
    try:
        phys = getattr(pltpu.get_tpu_info(), "vmem_capacity_bytes", None)
    except Exception:
        phys = None
    if not phys:
        phys = 64 * _MIB                         # conservative fallback (fits v7x)
    limit = min((phys * 3) // 4, 64 * _MIB)      # 64 MiB on v5e/v6e, 48 MiB on v7x
    budget = (limit * 3) // 4                    # headroom for compiler temporaries
    return limit, budget


def _pick_tile_rows(n, c, itemsize, budget_bytes):
    """Largest sublane-aligned row tile whose estimated VMEM working set
    (2x double-buffered native-dtype input block + ~4 f32-wide temporaries)
    fits the budget.  Byte-limited only — no row-count cap."""
    sublane = 8 * (4 // max(1, itemsize))        # 8 (f32) / 16 (bf16) / 32 (int8)
    per_row = c * (2 * itemsize + 4 * 4)
    if n * per_row <= budget_bytes:
        return n                                 # whole batch in a single tile
    tn = max(sublane, budget_bytes // per_row)
    return max(sublane, (tn // sublane) * sublane)


def ce_focal_loss(pred, target, gamma=2, tile_rows=None):
    """pred: (N, C) logits (any float dtype); target: (N,) int labels in [0, C).
    Returns scalar mean focal loss (gamma=gamma, alpha=None, reduction='mean')."""
    n, c = pred.shape
    target_2d = target.reshape(n, 1).astype(jnp.int32)

    vmem_limit, tile_budget = _vmem_limits()
    itemsize = jnp.dtype(pred.dtype).itemsize
    tn = tile_rows if tile_rows is not None else _pick_tile_rows(n, c, itemsize,
                                                                 tile_budget)
    tn = min(tn, n)

    num_tiles = pl.cdiv(n, tn)
    p_count = 2 if num_tiles >= 2 else 1         # both TCs on v7x; no-op on v5e/v6e
    j_count = pl.cdiv(num_tiles, p_count)
    needs_mask = (p_count * j_count * tn) != n

    if p_count * j_count == num_tiles:
        def row_block(p, j):
            return (p * j_count + j, 0)
    else:
        def row_block(p, j):
            # Clamp the duplicate (fully out-of-range) tiles of the last slice
            # onto the last real tile; their rows are masked out in the kernel.
            return (jnp.minimum(p * j_count + j, num_tiles - 1), 0)

    kernel = functools.partial(_focal_loss_kernel, gamma=gamma, n_rows=n,
                               tile_rows=tn, tiles_per_slice=j_count,
                               needs_mask=needs_mask)

    partials = pl.pallas_call(
        kernel,
        out_shape=jax.ShapeDtypeStruct((p_count, 1), jnp.float32),
        grid=(p_count, j_count),
        in_specs=[
            pl.BlockSpec((tn, c), row_block),    # pred row-tile (native dtype)
            pl.BlockSpec((tn, 1), row_block),    # matching labels
        ],
        out_specs=pl.BlockSpec((1, 1), lambda p, j: (p, 0)),  # per-slice partial
        scratch_shapes=[pltpu.VMEM((1, 1), jnp.float32)],     # running sum
        compiler_params=pltpu.CompilerParams(
            dimension_semantics=("parallel", "arbitrary"),
            vmem_limit_bytes=vmem_limit,
        ),
    )(pred, target_2d)   # native dtype in; no wrapper-side astype

    return jnp.sum(partials) / jnp.float32(n)


def _reference(pred, target, gamma=2):
    log_sm = jax.nn.log_softmax(pred.astype(jnp.float32), axis=1)
    logpt = jnp.take_along_axis(log_sm, target.reshape(-1, 1), axis=1).reshape(-1)
    ce = -logpt
    pt = jnp.exp(logpt)
    return jnp.mean((1.0 - pt) ** gamma * ce)


if __name__ == "__main__":
    key = jax.random.PRNGKey(0)
    keys = jax.random.split(key, 8)

    # Case 1: batch fits one tile exactly (single tile, no mask, no clamp).
    n1, c1 = 8, 32
    pred1 = jax.random.normal(keys[0], (n1, c1), dtype=jnp.float32)
    tgt1 = jax.random.randint(keys[1], (n1,), 0, c1, dtype=jnp.int32)
    loss1 = jax.block_until_ready(ce_focal_loss(pred1, tgt1, gamma=2))
    ref1 = _reference(pred1, tgt1, gamma=2)
    assert jnp.allclose(loss1, ref1, atol=1e-5, rtol=1e-5), (loss1, ref1)

    # Case 2: N not a sublane multiple, C not lane-aligned (single full-dim tile).
    n2, c2 = 20, 37
    pred2 = jax.random.normal(keys[2], (n2, c2), dtype=jnp.float32)
    tgt2 = jax.random.randint(keys[3], (n2,), 0, c2, dtype=jnp.int32)
    loss2 = jax.block_until_ready(ce_focal_loss(pred2, tgt2, gamma=2))
    ref2 = _reference(pred2, tgt2, gamma=2)
    assert jnp.allclose(loss2, ref2, atol=1e-5, rtol=1e-5), (loss2, ref2)

    # Case 3: forced small tiles -> 2 parallel slices x 3 sequential tiles;
    # odd tile count (5) exercises the clamped duplicate tile + row mask.
    n3, c3 = 40, 64
    pred3 = jax.random.normal(keys[4], (n3, c3), dtype=jnp.float32)
    tgt3 = jax.random.randint(keys[5], (n3,), 0, c3, dtype=jnp.int32)
    loss3 = jax.block_until_ready(ce_focal_loss(pred3, tgt3, gamma=2, tile_rows=8))
    ref3 = _reference(pred3, tgt3, gamma=2)
    assert jnp.allclose(loss3, ref3, atol=1e-5, rtol=1e-5), (loss3, ref3)

    # Case 4: bf16 input with bf16-native 16-row tiles and a padded last tile.
    n4, c4 = 24, 32
    pred4 = jax.random.normal(keys[6], (n4, c4), dtype=jnp.float32).astype(jnp.bfloat16)
    tgt4 = jax.random.randint(keys[7], (n4,), 0, c4, dtype=jnp.int32)
    loss4 = jax.block_until_ready(ce_focal_loss(pred4, tgt4, gamma=2, tile_rows=16))
    ref4 = _reference(pred4, tgt4, gamma=2)
    assert jnp.allclose(loss4, ref4, atol=1e-4, rtol=1e-4), (loss4, ref4)

    print("KERNEL_OK")
</pallas_src>

<mosaic_0001>
module attributes {stable_mosaic.version = 11 : i64} {
  func.func @_focal_loss_kernel(%arg0: i32, %arg1: i32, %arg2: memref<8x32xf32, #tpu.memory_space<vmem>>, %arg3: memref<8x1xi32, #tpu.memory_space<vmem>>, %arg4: memref<1x1xf32, #tpu.memory_space<vmem>>, %arg5: memref<1x1xf32, #tpu.memory_space<vmem>>) attributes {dimension_semantics = [#tpu.dimension_semantics<parallel>, #tpu.dimension_semantics<arbitrary>], iteration_bounds = array<i64: 1, 1>, scalar_prefetch = 0 : i64, scratch_operands = 1 : i64, tpu.core_type = #tpu.core_type<tc>, window_params = [{transform_indices = @transform_0, window_bounds = array<i64: 8, 32>}, {transform_indices = @transform_1, window_bounds = array<i64: 8, 1>}, {transform_indices = @transform_2, window_bounds = array<i64: 1, 1>}]} {
    %c0_i32 = arith.constant 0 : i32
    %0 = arith.cmpi eq, %arg1, %c0_i32 : i32
    %1 = arith.extui %0 : i1 to i32
    %c0_i32_0 = arith.constant 0 : i32
    %2 = arith.cmpi ne, %1, %c0_i32_0 : i32
    scf.if %2 {
      %cst_16 = arith.constant 0.000000e+00 : f32
      %37 = vector.broadcast %cst_16 : f32 to vector<1x1xf32>
      %c0_17 = arith.constant 0 : index
      %c0_18 = arith.constant 0 : index
      %38 = vector.load %arg5[%c0_17, %c0_18] : memref<1x1xf32, #tpu.memory_space<vmem>>, vector<1x1xf32>
      tpu.vector_store %arg5[%c0_17, %c0_18], %37 {strides = array<i32>} : memref<1x1xf32, #tpu.memory_space<vmem>>, vector<1x1xf32>,
    } else {
    }
    %c0 = arith.constant 0 : index
    %c0_1 = arith.constant 0 : index
    %3 = vector.load %arg2[%c0, %c0_1] : memref<8x32xf32, #tpu.memory_space<vmem>>, vector<8x32xf32>
    %c0_2 = arith.constant 0 : index
    %c0_3 = arith.constant 0 : index
    %4 = vector.load %arg3[%c0_2, %c0_3] : memref<8x1xi32, #tpu.memory_space<vmem>>, vector<8x1xi32>
    %cst = arith.constant dense<0xFF800000> : vector<8xf32>
    %5 = vector.multi_reduction <maximumf>, %3, %cst [1] : vector<8x32xf32> to vector<8xf32>
    %6 = vector.shape_cast %5 : vector<8xf32> to vector<8x1xf32>
    %7 = vector.broadcast %6 : vector<8x1xf32> to vector<8x32xf32>
    %8 = arith.subf %3, %7 : vector<8x32xf32>
    %9 = math.exp %8 : vector<8x32xf32>
    %cst_4 = arith.constant dense<0.000000e+00> : vector<8xf32>
    %10 = vector.multi_reduction <add>, %9, %cst_4 [1] : vector<8x32xf32> to vector<8xf32>
    %11 = vector.shape_cast %10 : vector<8xf32> to vector<8x1xf32>
    %12 = math.log %11 : vector<8x1xf32>
    %13 = tpu.iota {dimensions = array<i32: 1>} : vector<8x32xi32>
    %14 = vector.broadcast %4 : vector<8x1xi32> to vector<8x32xi32>
    %15 = arith.cmpi eq, %13, %14 : vector<8x32xi32>
    %cst_5 = arith.constant 0.000000e+00 : f32
    %16 = vector.broadcast %cst_5 : f32 to vector<8x32xf32>
    %17 = arith.select %15, %3, %16 : vector<8x32xi1>, vector<8x32xf32>
    %cst_6 = arith.constant dense<0.000000e+00> : vector<8xf32>
    %18 = vector.multi_reduction <add>, %17, %cst_6 [1] : vector<8x32xf32> to vector<8xf32>
    %19 = vector.shape_cast %18 : vector<8xf32> to vector<8x1xf32>
    %20 = arith.subf %19, %6 : vector<8x1xf32>
    %21 = arith.subf %20, %12 : vector<8x1xf32>
    %cst_7 = arith.constant 0.000000e+00 : f32
    %22 = vector.broadcast %cst_7 : f32 to vector<8x1xf32>
    %23 = arith.subf %22, %21 : vector<8x1xf32>
    %24 = math.exp %21 : vector<8x1xf32>
    %cst_8 = arith.constant 1.000000e+00 : f32
    %25 = vector.broadcast %cst_8 : f32 to vector<8x1xf32>
    %26 = arith.subf %25, %24 : vector<8x1xf32>
    %27 = arith.mulf %26, %26 : vector<8x1xf32>
    %28 = arith.mulf %27, %23 : vector<8x1xf32>
    %c0_9 = arith.constant 0 : index
    %c0_10 = arith.constant 0 : index
    %29 = vector.load %arg5[%c0_9, %c0_10] : memref<1x1xf32, #tpu.memory_space<vmem>>, vector<1x1xf32>
    %cst_11 = arith.constant dense<0.000000e+00> : vector<1xf32>
    %30 = vector.multi_reduction <add>, %28, %cst_11 [0] : vector<8x1xf32> to vector<1xf32>
    %31 = vector.shape_cast %30 : vector<1xf32> to vector<1x1xf32>
    %32 = arith.addf %29, %31 : vector<1x1xf32>
    %c0_12 = arith.constant 0 : index
    %c0_13 = arith.constant 0 : index
    %33 = vector.load %arg5[%c0_12, %c0_13] : memref<1x1xf32, #tpu.memory_space<vmem>>, vector<1x1xf32>
    tpu.vector_store %arg5[%c0_12, %c0_13], %32 {strides = array<i32>} : memref<1x1xf32, #tpu.memory_space<vmem>>, vector<1x1xf32>,
    %c0_i32_14 = arith.constant 0 : i32
    %34 = arith.cmpi eq, %arg1, %c0_i32_14 : i32
    %35 = arith.extui %34 : i1 to i32
    %c0_i32_15 = arith.constant 0 : i32
    %36 = arith.cmpi ne, %35, %c0_i32_15 : i32
    scf.if %36 {
      %c0_16 = arith.constant 0 : index
      %c0_17 = arith.constant 0 : index
      %37 = vector.load %arg5[%c0_16, %c0_17] : memref<1x1xf32, #tpu.memory_space<vmem>>, vector<1x1xf32>
      %c0_18 = arith.constant 0 : index
      %c0_19 = arith.constant 0 : index
      %38 = vector.load %arg4[%c0_18, %c0_19] : memref<1x1xf32, #tpu.memory_space<vmem>>, vector<1x1xf32>
      tpu.vector_store %arg4[%c0_18, %c0_19], %37 {strides = array<i32>} : memref<1x1xf32, #tpu.memory_space<vmem>>, vector<1x1xf32>,
    } else {
    }
    return
  }
  func.func @transform_0(%arg0: i32, %arg1: i32) -> (i32, i32) {
    %c1_i32 = arith.constant 1 : i32
    %0 = arith.muli %arg0, %c1_i32 : i32
    %1 = arith.addi %0, %arg1 : i32
    %c0_i32 = arith.constant 0 : i32
    %c0_i32_0 = arith.constant 0 : i32
    return %1, %c0_i32 : i32, i32
  }
  func.func @transform_1(%arg0: i32, %arg1: i32) -> (i32, i32) {
    %c1_i32 = arith.constant 1 : i32
    %0 = arith.muli %arg0, %c1_i32 : i32
    %1 = arith.addi %0, %arg1 : i32
    %c0_i32 = arith.constant 0 : i32
    %c0_i32_0 = arith.constant 0 : i32
    return %1, %c0_i32 : i32, i32
  }
  func.func @transform_2(%arg0: i32, %arg1: i32) -> (i32, i32) {
    %c0_i32 = arith.constant 0 : i32
    %c0_i32_0 = arith.constant 0 : i32
    return %arg0, %c0_i32 : i32, i32
  }
}

</mosaic_0001>

<llo_original>
// kernel: tpu_custom_call.1
$region0: #{tpu_custom_call.1}
  #allocation0 [shape = 'u32[]', space=smem, size = 0x4, offset = 0x4, fixed_abs, tag = 'smem constant byte address 0x4 - core index']
  #allocation1 [shape = 'u32[72,128]{1,0:T(1,128)}', space=vmem, size = 0x9000, scoped, tag = 'internal scratch']
  #allocation2 [shape = 'f32[1,1]{1,0:T(1,128)}', space=vmem, size = 0x200, scoped, tag = 'scratch operand']
  %s0 = inlined_call_operand.vmem [shape: f32[8,32], index: 0, kind: input, shape index: {}]
  %s1 = inlined_call_operand.vmem [shape: s32[8,1], index: 1, kind: input, shape index: {}]
  %s2 = inlined_call_operand.hbm [shape: f32[1,1], index: 2, kind: output, shape index: {}]
  %s3 = sld [smem:[#allocation0]]
  $region26: #{tpu_custom_call.1} parent=0
    _
  %s5 = ssub.s32 1, %s3
  %s6 = scalar_select 0, %s5, %s3
  $region1: #{tpu_custom_call.1} parent=0
    #allocation3 [shape = 'u8[512]{0}', space=vmem, size = 0x400, scoped, tag = 'output window, operand 0, single buffered']
    #allocation4 [shape = 's32[1]{0}', space=sflag, size = 0x4, scoped, tag = 'scoped memory for tpu_custom_call.1']
    %7 = vsyncpa [#allocation4], 0
    // Predicated region
    $region2: #{tpu_custom_call.1} parent=1 // pred_check
      _
    $region3: #{tpu_custom_call.1} parent=1 // pred_check_branch
      %9 = sbr.rel (0) target = $region5
    $region4: #{tpu_custom_call.1} parent=1 // pred_region
      %s10 = sadd.s32 0, 0
      %p11 = scmp.lt.s32.totalorder %s10, 0
      %s12 = scalar_select %p11, %s10, 0
      %s13 = smul.addr %s12, 8
      %s14 = scalar_lea.vmem %s0, %s13
      %s15 = sadd.s32 0, 0
    $region5: #{tpu_custom_call.1} parent=1 // pred_fallthru
      _
    // Predicated region
    $region6: #{tpu_custom_call.1} parent=1 // pred_check
      _
    $region7: #{tpu_custom_call.1} parent=1 // pred_check_branch
      %17 = sbr.rel (0) target = $region9
    $region8: #{tpu_custom_call.1} parent=1 // pred_region
      %s18 = sadd.s32 0, 0
      %p19 = scmp.lt.s32.totalorder %s18, 0
      %s20 = scalar_select %p19, %s18, 0
      %s21 = smul.addr %s20, 8
      %s22 = scalar_lea.vmem %s1, %s21
      %s23 = sadd.s32 0, 0
    $region9: #{tpu_custom_call.1} parent=1 // pred_fallthru
      _
    %s24 = sadd.s32 0, 0
    %p25 = scmp.lt.s32.totalorder %s24, 0
    %s26 = scalar_select %p25, %s24, 0
    %s27 = smul.addr %s26, 8
    %s28 = scalar_lea.vmem %s0, %s27
    %s29 = sadd.s32 0, 0
    %p30 = scmp.lt.s32.totalorder %s29, 0
    %s31 = scalar_select %p30, %s29, 0
    %s32 = smul.addr %s31, 8
    %s33 = scalar_lea.vmem %s1, %s32
    %s34 = sadd.s32 0, 0
    %p35 = scmp.lt.s32.totalorder %s34, 0
    %s36 = scalar_select %p35, %s34, 0
    %s37 = smul.addr %s36, 8
    %s38 = scalar_lea.vmem %s0, %s37
    %s39 = sadd.s32 0, 0
    %s40 = sadd.s32 0, 0
    %p41 = scmp.lt.s32.totalorder %s40, 0
    %s42 = scalar_select %p41, %s40, 0
    %s43 = smul.addr %s42, 8
    %s44 = scalar_lea.vmem %s1, %s43
    %s45 = sadd.s32 0, 0
    %p46 = scmp.eq.s32.totalorder 0, 0
    // Predicated region
    $region10: #{tpu_custom_call.1} parent=1 // pred_check
      %p47 = pneg %p46
    $region11: #{tpu_custom_call.1} parent=1 // pred_check_branch
      %49 = sbr.rel (%p47) target = $region13
    $region12: #{tpu_custom_call.1} parent=1 // pred_region
      %vm50 = vcmask 0
      %51 = vst.msk [vmem:[#allocation2] sm:$0x1] %vm50, 0.0
    $region13: #{tpu_custom_call.1} parent=1 // pred_fallthru
      _
    %v52 = vld [vmem:[%s38] sm:$0xff]
    %v53 = vld [vmem:[%s44] sm:$0xff]
    %vm54 = vcmask 261120
    %v55 = vsel %vm54, %v52, -inf
    %56 = vmax.xlane.f32.xlu0 %v55
    %v57 = vpop.xlane.xlu0 %56
    %v58 = vsub.f32 %v52, %v57
    %v59 = vmul.f32 %v58, 1.442695
    %v60 = vpow.pop %v59
    %v61 = vsel %vm54, %v60, 0.0
    %62 = vadd.xlane.f32.xlu0 %v61
    %v63 = vpop.xlane.xlu0 %62
    %v64 = vlog2.pop %v63
    %v65 = vmul.f32 %v64, 0.6931472
    %v66 = vlaneseq
    %v67 = vand.u32 %v66, 127
    %68 = vset.pattern.permute.xlu0 0
    %69 = vperm.xlu0 %68, %v53
    %v70 = vpop.permute.xlu0 %69
    %vm71 = vcmp.eq.s32.totalorder %v67, %v70
    %v72 = vsel %vm71, %v52, 0.0
    %v73 = vsel %vm54, %v72, 0.0
    %74 = vadd.xlane.f32.xlu0 %v73
    %v75 = vpop.xlane.xlu0 %74
    %v76 = vsub.f32 %v75, %v57
    %v77 = vsub.f32 %v76, %v65
    %v78 = vsub.f32 0.0, %v77
    %v79 = vmul.f32 %v77, 1.442695
    %v80 = vpow.pop %v79
    %v81 = vsub.f32 1.0, %v80
    %v82 = vmul.f32 %v81, %v81
    %v83 = vmul.f32 %v82, %v78
    %v84 = vld [vmem:[#allocation2] sm:$0x1]
    %v85 = vrot.slane %v83, 4
    %v86 = vadd.f32 %v83, %v85
    %v87 = vrot.slane %v86, 2
    %v88 = vadd.f32 %v86, %v87
    %v89 = vrot.slane %v88, 1
    %v90 = vadd.f32 %v88, %v89
    %v91 = vadd.f32 %v84, %v90
    %vm92 = vcmask 0
    %93 = vst.msk [vmem:[#allocation2] sm:$0x1] %vm92, %v91
    // Predicated region
    $region14: #{tpu_custom_call.1} parent=1 // pred_check
      %p94 = pneg %p46
    $region15: #{tpu_custom_call.1} parent=1 // pred_check_branch
      %96 = sbr.rel (%p94) target = $region17
    $region16: #{tpu_custom_call.1} parent=1 // pred_region
      %v97 = vld [vmem:[#allocation2] sm:$0x1]
      %98 = vst.msk [vmem:[#allocation3] sm:$0x1] %vm92, %v97
    $region17: #{tpu_custom_call.1} parent=1 // pred_fallthru
      _
    // Predicated region
    $region18: #{tpu_custom_call.1} parent=1 // pred_check
      _
    $region19: #{tpu_custom_call.1} parent=1 // pred_check_branch
      %100 = sbr.rel (0) target = $region21
    $region20: #{tpu_custom_call.1} parent=1 // pred_region
      %102 = vsyncadd [#allocation4], 0
      %s104 = sshll.u32 [#allocation3], 4
      %s105 = int_to_ptr.vmem [resolvable:$true] %s104
      %s106 = sshll.u32 %s2, 4
      %s107 = int_to_ptr.hbm [resolvable:$true] %s106
      %109 = dma.vmem_to_hbm [thread:$0]  %s105, 16, %s107, [#allocation4]
    $region21: #{tpu_custom_call.1} parent=1 // pred_fallthru
      _
    // Predicated region
    $region22: #{tpu_custom_call.1} parent=1 // pred_check
      _
    $region23: #{tpu_custom_call.1} parent=1 // pred_check_branch
      %111 = sbr.rel (0) target = $region25
    $region24: #{tpu_custom_call.1} parent=1 // pred_region
      %113 = dma.done [#allocation4], 16
    $region25: #{tpu_custom_call.1} parent=1 // pred_fallthru
      _
    %114 = vsyncpa [#allocation4], 1

</llo_original>
